<compile_context>
chip_gen: v5e
topology: v5e:2x2
jax: 0.10.0
libtpu: 0.0.40
codegen_flags: <defaults>
</compile_context>

<pallas_src>
import jax
import jax.numpy as jnp
from jax.experimental import pallas as pl
from jax.experimental.pallas import tpu as pltpu


def _round_up(v, m):
    return ((v + m - 1) // m) * m


# f32 upcast temporaries (x_f32, t_f32 + exp/product transients) that live in
# VMEM alongside the double-buffered native tiles, measured in "f32 copies of
# one input tile".  Used when budgeting block sizes (count the upcasts, not
# just the DMA'd bytes -- this is what actually hits the v7x 64 MiB limit).
_F32_TEMP_COPIES = 3.5


def _chip_budgets():
    """Generation-aware VMEM limit / core-count guess.  Conservative defaults."""
    vmem_limit = 44 * 1024 * 1024      # v7x-safe: 64 MiB physical, leave headroom
    two_cores = True                   # v7x: 2 TensorCores per chip
    try:
        info = pltpu.get_tpu_info()
        cap = int(getattr(info, "vmem_capacity_bytes", 64 * 1024 * 1024))
        if cap >= 100 * 1024 * 1024:   # v5e / v6e: 128 MiB physical, single TC
            vmem_limit = 80 * 1024 * 1024
            two_cores = False
    except Exception:
        pass                           # interpret mode / query failure: keep safe defaults
    return vmem_limit, two_cores


def _pick_block_c(C, cap_c):
    """Pick a class-tile size; prefer a multiple-of-128 divisor of C (no ragged tile)."""
    if C <= cap_c:
        return C
    best = 0
    if C % 128 == 0:
        d = (cap_c // 128) * 128
        while d >= 512:
            if C % d == 0:
                best = d
                break
            d -= 128
    if best:
        return best
    return max(128, (cap_c // 128) * 128)   # ragged last tile, mask gated in-kernel


# --------------------------------------------------------------------------
# Path A: whole class row resident in VMEM (single grid axis over rows).
# --------------------------------------------------------------------------
def _smooth_ce_kernel(ls_ref, x_ref, t_ref, o_ref):
    # ls_ref: (1,) f32 in SMEM; x_ref/t_ref: (block_n, C) tiles; o_ref: (block_n, 1)
    x = x_ref[...].astype(jnp.float32)
    t = t_ref[...].astype(jnp.float32)

    m = jnp.max(x, axis=1, keepdims=True)
    lse = m + jnp.log(jnp.sum(jnp.exp(x - m), axis=1, keepdims=True))
    sum_t = jnp.sum(t, axis=1, keepdims=True)
    sum_tx = jnp.sum(t * x, axis=1, keepdims=True)

    # sum_c (-(x - lse)) * t * ls  ==  ls * (lse * sum_t - sum_tx)
    o_ref[...] = ls_ref[0] * (lse * sum_t - sum_tx)


# --------------------------------------------------------------------------
# Path B: class axis tiled -> online logsumexp with per-row accumulators.
# --------------------------------------------------------------------------
def _make_online_kernel(C, block_c):
    ragged = (C % block_c) != 0
    NEG_LARGE = -1e30  # Python float (NOT a traced constant); assumes real logits > -1e30

    def kernel(ls_ref, x_ref, t_ref, o_ref, m_acc, l_acc, st_acc, stx_acc):
        c = pl.program_id(1)
        last = pl.num_programs(1) - 1

        @pl.when(c == 0)
        def _init():
            m_acc[...] = jnp.full_like(m_acc, -jnp.inf)
            l_acc[...] = jnp.zeros_like(l_acc)
            st_acc[...] = jnp.zeros_like(st_acc)
            stx_acc[...] = jnp.zeros_like(stx_acc)

        x = x_ref[...].astype(jnp.float32)
        t = t_ref[...].astype(jnp.float32)

        def update(xv, tv):
            m_prev = m_acc[...]
            m_new = jnp.maximum(m_prev, jnp.max(xv, axis=1, keepdims=True))
            l_acc[...] = l_acc[...] * jnp.exp(m_prev - m_new) + jnp.sum(
                jnp.exp(xv - m_new), axis=1, keepdims=True)
            st_acc[...] += jnp.sum(tv, axis=1, keepdims=True)
            stx_acc[...] += jnp.sum(tv * xv, axis=1, keepdims=True)
            m_acc[...] = m_new

        if ragged:
            # Mask only on the final (partial) class tile; full tiles take the
            # unmasked fast path (saves ~4 VALU ops/elem on every other tile).
            @pl.when(c != last)
            def _full_tile():
                update(x, t)

            @pl.when(c == last)
            def _partial_tile():
                col = c * block_c + jax.lax.broadcasted_iota(jnp.int32, x.shape, 1)
                valid = col < C
                update(jnp.where(valid, x, NEG_LARGE),   # exp() underflows to 0
                       jnp.where(valid, t, 0.0))
        else:
            update(x, t)

        @pl.when(c == last)
        def _finalize():
            lse = m_acc[...] + jnp.log(l_acc[...])
            o_ref[...] = ls_ref[0] * (lse * st_acc[...] - stx_acc[...])

    return kernel


# --------------------------------------------------------------------------
# Wrapper
# --------------------------------------------------------------------------
def smooth_ce_loss(x, target, *, ls_=0.9, block_n=None, block_c=None):
    """x, target: [N, C] arrays (any float dtype). Returns per-sample loss [N] (f32)."""
    N, C = x.shape
    assert target.shape == (N, C), "x and target must both be [N, C]"

    # Do NOT pre-cast to f32 and do NOT pad: native-dtype DMA (e.g. bf16) halves
    # HBM traffic, and a host-side pad would round-trip both [N,C] inputs
    # through HBM before the kernel even starts.
    in_bytes = x.dtype.itemsize + target.dtype.itemsize

    vmem_limit, two_cores = _chip_budgets()
    budget = int(vmem_limit * 0.75)                   # headroom for outs/acc/internal scratch
    per_elem = 2 * in_bytes + 4.0 * _F32_TEMP_COPIES  # 2x double-buffered native + f32 temps

    # ---- class tiling -------------------------------------------------------
    if block_c is None:
        rows_at_full_c = int(budget // max(1, int(C * per_elem)))
        if rows_at_full_c >= 8:
            block_c = C                                # Path A: full class row resident
        else:
            cap_c = 2048 if two_cores else 8192        # lift the cap on 1-TC parts
            block_c = _pick_block_c(C, cap_c)
    block_c = min(block_c, C)
    if block_c < C:
        block_c = max(128, (block_c // 128) * 128)     # lane-dim constraint
        if block_c >= C:
            block_c = C

    # ---- row tiling ----------------------------------------------------------
    # Mem-bound kernel: take the biggest row tile the (f32-temp-aware) VMEM
    # budget allows; per-step pipeline overhead (~0.35us) amortizes away.
    n_ceil = _round_up(max(N, 1), 8)
    if block_n is None:
        bn = int(budget // max(1, int(block_c * per_elem)))
        bn = max(8, min((bn // 8) * 8, 8192))
        if two_cores:
            # keep >= 4 steps on the parallel N axis so both v7x TCs stay busy;
            # on single-TC v5e/v6e the grid is a serial loop, so no cap there.
            bn = min(bn, max(8, _round_up(pl.cdiv(max(N, 1), 4), 8)))
        block_n = bn
    block_n = max(8, min((block_n // 8) * 8, n_ceil))

    grid_n = pl.cdiv(N, block_n)     # last row block may be partial; OOB rows discarded
    grid_c = pl.cdiv(C, block_c)

    ls_arr = jnp.full((1,), ls_, dtype=jnp.float32)
    out_shape = jax.ShapeDtypeStruct((N, 1), jnp.float32)
    smem_spec = pl.BlockSpec(memory_space=pltpu.MemorySpace.SMEM)

    if grid_c == 1:
        out = pl.pallas_call(
            _smooth_ce_kernel,
            out_shape=out_shape,
            grid_spec=pltpu.PrefetchScalarGridSpec(
                num_scalar_prefetch=0,
                grid=(grid_n,),
                in_specs=[
                    smem_spec,
                    pl.BlockSpec((block_n, C), lambda i: (i, 0)),
                    pl.BlockSpec((block_n, C), lambda i: (i, 0)),
                ],
                out_specs=pl.BlockSpec((block_n, 1), lambda i: (i, 0)),
            ),
            compiler_params=pltpu.CompilerParams(
                dimension_semantics=("parallel",),
                vmem_limit_bytes=vmem_limit,
            ),
        )(ls_arr, x, target)
    else:
        kernel = _make_online_kernel(C, block_c)
        out = pl.pallas_call(
            kernel,
            out_shape=out_shape,
            grid_spec=pltpu.PrefetchScalarGridSpec(
                num_scalar_prefetch=0,
                grid=(grid_n, grid_c),
                in_specs=[
                    smem_spec,
                    pl.BlockSpec((block_n, block_c), lambda i, c: (i, c)),
                    pl.BlockSpec((block_n, block_c), lambda i, c: (i, c)),
                ],
                out_specs=pl.BlockSpec((block_n, 1), lambda i, c: (i, 0)),
                scratch_shapes=[pltpu.VMEM((block_n, 1), jnp.float32)] * 4,
            ),
            compiler_params=pltpu.CompilerParams(
                dimension_semantics=("parallel", "arbitrary"),
                vmem_limit_bytes=vmem_limit,
            ),
        )(ls_arr, x, target)

    return out[:, 0]


def _reference(x, target, ls_):
    logprobs = jax.nn.log_softmax(x.astype(jnp.float32), axis=1)
    return jnp.sum(-logprobs * (target.astype(jnp.float32) * ls_), axis=1)


if __name__ == "__main__":
    key = jax.random.PRNGKey(0)
    k1, k2, k3, k4 = jax.random.split(key, 4)

    # Test 1: module-default path (full class row resident), N=8, C=32.
    N, C = 8, 32
    x = jax.random.normal(k1, (N, C), dtype=jnp.float32)
    labels = jax.random.randint(k2, (N,), 0, C)
    target = jax.nn.one_hot(labels, C, dtype=jnp.float32)
    loss = smooth_ce_loss(x, target)          # ls_ = 0.9 default
    jax.block_until_ready(loss)
    assert loss.shape == (N,)
    assert jnp.allclose(loss, _reference(x, target, 0.9), atol=1e-5, rtol=1e-5)

    # Test 2: force the C-tiled online-logsumexp path (block_c divides C, no mask).
    N2, C2 = 16, 256
    x2 = jax.random.normal(k3, (N2, C2), dtype=jnp.float32)
    t2 = jax.nn.softmax(jax.random.normal(k4, (N2, C2), dtype=jnp.float32), axis=1)
    loss2 = smooth_ce_loss(x2, t2, block_n=8, block_c=128)
    jax.block_until_ready(loss2)
    assert jnp.allclose(loss2, _reference(x2, t2, 0.9), atol=1e-4, rtol=1e-4)

    # Test 3: C-tiled path with a ragged last class block (gated mask) + custom ls_.
    N3, C3 = 8, 160
    x3 = jax.random.normal(k1, (N3, C3), dtype=jnp.float32)
    t3 = jax.nn.one_hot(jax.random.randint(k2, (N3,), 0, C3), C3, dtype=jnp.float32)
    loss3 = smooth_ce_loss(x3, t3, ls_=0.5, block_n=8, block_c=128)
    jax.block_until_ready(loss3)
    assert jnp.allclose(loss3, _reference(x3, t3, 0.5), atol=1e-4, rtol=1e-4)

    print("KERNEL_OK")
</pallas_src>

<mosaic_0001>
module attributes {stable_mosaic.version = 11 : i64} {
  func.func @_smooth_ce_kernel(%arg0: i32, %arg1: memref<1xf32, #tpu.memory_space<smem>>, %arg2: memref<8x32xf32, #tpu.memory_space<vmem>>, %arg3: memref<8x32xf32, #tpu.memory_space<vmem>>, %arg4: memref<8x1xf32, #tpu.memory_space<vmem>>) attributes {dimension_semantics = [#tpu.dimension_semantics<parallel>], iteration_bounds = array<i64: 1>, scalar_prefetch = 0 : i64, scratch_operands = 0 : i64, tpu.core_type = #tpu.core_type<tc>, window_params = [{transform_indices = @transform_0, window_bounds = array<i64: 1>}, {transform_indices = @transform_1, window_bounds = array<i64: 8, 32>}, {transform_indices = @transform_2, window_bounds = array<i64: 8, 32>}, {transform_indices = @transform_3, window_bounds = array<i64: 8, 1>}]} {
    %c0 = arith.constant 0 : index
    %c0_0 = arith.constant 0 : index
    %0 = vector.load %arg2[%c0, %c0_0] : memref<8x32xf32, #tpu.memory_space<vmem>>, vector<8x32xf32>
    %c0_1 = arith.constant 0 : index
    %c0_2 = arith.constant 0 : index
    %1 = vector.load %arg3[%c0_1, %c0_2] : memref<8x32xf32, #tpu.memory_space<vmem>>, vector<8x32xf32>
    %cst = arith.constant dense<0xFF800000> : vector<8xf32>
    %2 = vector.multi_reduction <maximumf>, %0, %cst [1] : vector<8x32xf32> to vector<8xf32>
    %3 = vector.shape_cast %2 : vector<8xf32> to vector<8x1xf32>
    %4 = vector.broadcast %3 : vector<8x1xf32> to vector<8x32xf32>
    %5 = arith.subf %0, %4 : vector<8x32xf32>
    %6 = math.exp %5 : vector<8x32xf32>
    %cst_3 = arith.constant dense<0.000000e+00> : vector<8xf32>
    %7 = vector.multi_reduction <add>, %6, %cst_3 [1] : vector<8x32xf32> to vector<8xf32>
    %8 = vector.shape_cast %7 : vector<8xf32> to vector<8x1xf32>
    %9 = math.log %8 : vector<8x1xf32>
    %10 = arith.addf %3, %9 : vector<8x1xf32>
    %cst_4 = arith.constant dense<0.000000e+00> : vector<8xf32>
    %11 = vector.multi_reduction <add>, %1, %cst_4 [1] : vector<8x32xf32> to vector<8xf32>
    %12 = vector.shape_cast %11 : vector<8xf32> to vector<8x1xf32>
    %13 = arith.mulf %1, %0 : vector<8x32xf32>
    %cst_5 = arith.constant dense<0.000000e+00> : vector<8xf32>
    %14 = vector.multi_reduction <add>, %13, %cst_5 [1] : vector<8x32xf32> to vector<8xf32>
    %15 = vector.shape_cast %14 : vector<8xf32> to vector<8x1xf32>
    %c0_6 = arith.constant 0 : index
    %16 = memref.load %arg1[%c0_6] : memref<1xf32, #tpu.memory_space<smem>>
    %17 = arith.mulf %10, %12 : vector<8x1xf32>
    %18 = arith.subf %17, %15 : vector<8x1xf32>
    %19 = vector.broadcast %16 : f32 to vector<8x1xf32>
    %20 = arith.mulf %19, %18 : vector<8x1xf32>
    %c0_7 = arith.constant 0 : index
    %c0_8 = arith.constant 0 : index
    %21 = vector.load %arg4[%c0_7, %c0_8] : memref<8x1xf32, #tpu.memory_space<vmem>>, vector<8x1xf32>
    tpu.vector_store %arg4[%c0_7, %c0_8], %20 {strides = array<i32>} : memref<8x1xf32, #tpu.memory_space<vmem>>, vector<8x1xf32>,
    return
  }
  func.func @transform_0(%arg0: i32) -> i32 {
    %c0_i32 = arith.constant 0 : i32
    %c0_i32_0 = arith.constant 0 : i32
    return %c0_i32 : i32
  }
  func.func @transform_1(%arg0: i32) -> (i32, i32) {
    %c0_i32 = arith.constant 0 : i32
    %c0_i32_0 = arith.constant 0 : i32
    return %arg0, %c0_i32 : i32, i32
  }
  func.func @transform_2(%arg0: i32) -> (i32, i32) {
    %c0_i32 = arith.constant 0 : i32
    %c0_i32_0 = arith.constant 0 : i32
    return %arg0, %c0_i32 : i32, i32
  }
  func.func @transform_3(%arg0: i32) -> (i32, i32) {
    %c0_i32 = arith.constant 0 : i32
    %c0_i32_0 = arith.constant 0 : i32
    return %arg0, %c0_i32 : i32, i32
  }
}

</mosaic_0001>

<llo_original>
// kernel: tpu_custom_call.1
$region0: #{tpu_custom_call.1}
  #allocation0 [shape = 'u32[]', space=smem, size = 0x4, offset = 0x4, fixed_abs, tag = 'smem constant byte address 0x4 - core index']
  #allocation1 [shape = 'u32[72,128]{1,0:T(1,128)}', space=vmem, size = 0x9000, scoped, tag = 'internal scratch']
  #allocation2 [shape = 'f32[1]{0:T(128)S(6)}', space=smem, size = 0x200, scoped, tag = 'scoped memory for tpu_custom_call.1']
  %s0 = inlined_call_operand.<no memory space> [shape: f32[1], index: 0, kind: input, shape index: {}]
  %s1 = inlined_call_operand.hbm [shape: f32[8,32], index: 1, kind: input, shape index: {}]
  %s2 = inlined_call_operand.hbm [shape: f32[8,32], index: 2, kind: input, shape index: {}]
  %s3 = inlined_call_operand.vmem [shape: f32[8,1], index: 3, kind: output, shape index: {}]
  %s4 = sld [smem:[#allocation0]]
  $region30: #{tpu_custom_call.1} parent=0
    _
  %s6 = ssub.s32 1, %s4
  %s7 = scalar_select 0, %s6, %s4
  %8 = sst [smem:[#allocation2]] %s0
  $region1: #{tpu_custom_call.1} parent=0
    #allocation3 [shape = 'u8[4096]{0}', space=vmem, size = 0x1000, scoped, tag = 'input window, operand 1, single buffered']
    #allocation4 [shape = 's32[1]{0}', space=sflag, size = 0x4, scoped, tag = 'scoped memory for tpu_custom_call.1']
    #allocation5 [shape = 'u8[4096]{0}', space=vmem, size = 0x1000, scoped, tag = 'input window, operand 2, single buffered']
    #allocation6 [shape = 's32[1]{0}', space=sflag, size = 0x4, scoped, tag = 'scoped memory for tpu_custom_call.1']
    %9 = vsyncpa [#allocation4], 0
    %10 = vsyncpa [#allocation6], 0
    // Predicated region
    $region2: #{tpu_custom_call.1} parent=1 // pred_check
      _
    $region3: #{tpu_custom_call.1} parent=1 // pred_check_branch
      %12 = sbr.rel (0) target = $region5
    $region4: #{tpu_custom_call.1} parent=1 // pred_region
      _
    $region5: #{tpu_custom_call.1} parent=1 // pred_fallthru
      _
    // Predicated region
    $region6: #{tpu_custom_call.1} parent=1 // pred_check
      _
    $region7: #{tpu_custom_call.1} parent=1 // pred_check_branch
      %14 = sbr.rel (0) target = $region9
    $region8: #{tpu_custom_call.1} parent=1 // pred_region
      %16 = vsyncadd [#allocation4], 0
      %s18 = sshll.u32 %s1, 4
      %s19 = int_to_ptr.hbm [resolvable:$true] %s18
      %s20 = sshll.u32 [#allocation3], 4
      %s21 = int_to_ptr.vmem [resolvable:$true] %s20
      %23 = dma.hbm_to_vmem [thread:$0]  %s19, 128, %s21, [#allocation4]
    $region9: #{tpu_custom_call.1} parent=1 // pred_fallthru
      _
    // Predicated region
    $region10: #{tpu_custom_call.1} parent=1 // pred_check
      _
    $region11: #{tpu_custom_call.1} parent=1 // pred_check_branch
      %25 = sbr.rel (0) target = $region13
    $region12: #{tpu_custom_call.1} parent=1 // pred_region
      %27 = vsyncadd [#allocation6], 0
      %s29 = sshll.u32 %s2, 4
      %s30 = int_to_ptr.hbm [resolvable:$true] %s29
      %s31 = sshll.u32 [#allocation5], 4
      %s32 = int_to_ptr.vmem [resolvable:$true] %s31
      %34 = dma.hbm_to_vmem [thread:$0]  %s30, 128, %s32, [#allocation6]
    $region13: #{tpu_custom_call.1} parent=1 // pred_fallthru
      _
    // Predicated region
    $region14: #{tpu_custom_call.1} parent=1 // pred_check
      _
    $region15: #{tpu_custom_call.1} parent=1 // pred_check_branch
      %36 = sbr.rel (0) target = $region17
    $region16: #{tpu_custom_call.1} parent=1 // pred_region
      %38 = dma.done [#allocation4], 128
    $region17: #{tpu_custom_call.1} parent=1 // pred_fallthru
      _
    // Predicated region
    $region18: #{tpu_custom_call.1} parent=1 // pred_check
      _
    $region19: #{tpu_custom_call.1} parent=1 // pred_check_branch
      %40 = sbr.rel (0) target = $region21
    $region20: #{tpu_custom_call.1} parent=1 // pred_region
      %42 = dma.done [#allocation6], 128
    $region21: #{tpu_custom_call.1} parent=1 // pred_fallthru
      _
    %v43 = vld [vmem:[#allocation3] sm:$0xff]
    %v44 = vld [vmem:[#allocation5] sm:$0xff]
    %vm45 = vcmask 261120
    %v46 = vsel %vm45, %v43, -inf
    %47 = vmax.xlane.f32.xlu0 %v46
    %v48 = vpop.xlane.xlu0 %47
    %v49 = vsub.f32 %v43, %v48
    %v50 = vmul.f32 %v49, 1.442695
    %v51 = vpow.pop %v50
    %v52 = vsel %vm45, %v51, 0.0
    %53 = vadd.xlane.f32.xlu0 %v52
    %v54 = vpop.xlane.xlu0 %53
    %v55 = vlog2.pop %v54
    %v56 = vmul.f32 %v55, 0.6931472
    %v57 = vadd.f32 %v48, %v56
    %v58 = vsel %vm45, %v44, 0.0
    %59 = vadd.xlane.f32.xlu0 %v58
    %v60 = vpop.xlane.xlu0 %59
    %v61 = vmul.f32 %v44, %v43
    %v62 = vsel %vm45, %v61, 0.0
    %63 = vadd.xlane.f32.xlu0 %v62
    %v64 = vpop.xlane.xlu0 %63
    %s65 = sld [smem:[#allocation2]]
    %v66 = vmul.f32 %v57, %v60
    %v67 = vsub.f32 %v66, %v64
    %v68 = vstv %s65
    %v69 = vmul.f32 %v68, %v67
    %vm70 = vcmask 7168
    %71 = vst.msk [vmem:[%s3] sm:$0xff] %vm70, %v69
    // Predicated region
    $region22: #{tpu_custom_call.1} parent=1 // pred_check
      _
    $region23: #{tpu_custom_call.1} parent=1 // pred_check_branch
      %73 = sbr.rel (0) target = $region25
    $region24: #{tpu_custom_call.1} parent=1 // pred_region
      _
    $region25: #{tpu_custom_call.1} parent=1 // pred_fallthru
      _
    // Predicated region
    $region26: #{tpu_custom_call.1} parent=1 // pred_check
      _
    $region27: #{tpu_custom_call.1} parent=1 // pred_check_branch
      %75 = sbr.rel (0) target = $region29
    $region28: #{tpu_custom_call.1} parent=1 // pred_region
      _
    $region29: #{tpu_custom_call.1} parent=1 // pred_fallthru
      _
    %76 = vsyncpa [#allocation4], 1
    %77 = vsyncpa [#allocation6], 1

</llo_original>
